<compile_context>
chip_gen: v5e
topology: v5e:2x2
jax: 0.10.0
libtpu: 0.0.40
codegen_flags: <defaults>
</compile_context>

<pallas_src>
import functools

import jax
import jax.numpy as jnp
from jax.experimental import pallas as pl
from jax.experimental.pallas import tpu as pltpu

LANE = 128


def _round_up(x, m):
    return ((x + m - 1) // m) * m


def _vmem_capacity_bytes():
    try:
        info = pltpu.get_tpu_info()
        cap = getattr(info, "vmem_capacity_bytes", None)
        if cap:
            return int(cap)
    except Exception:
        pass
    return 64 * 1024 * 1024  # conservative fallback: v7x per-TC VMEM


_VMEM_CAP = _vmem_capacity_bytes()
_VMEM_LIMIT = int(_VMEM_CAP * 0.75)          # ~48 MiB on v7x, ~96 MiB on v5e/v6e
_RESIDENT_XW_BUDGET = int(_VMEM_CAP * 0.40)  # cap for (double-buffered) resident XW


def _plan_tiles(num_nodes):
    """Return (n_pad, tm, tk) for the aggregate kernel."""
    if num_nodes <= 1024:
        n_pad = _round_up(num_nodes, 128)
        return n_pad, 128, n_pad            # full K in one step
    if num_nodes <= 8192:
        n_pad = _round_up(num_nodes, 512)
        return n_pad, 512, 512
    n_pad = _round_up(num_nodes, 1024)
    return n_pad, 512, 1024


def _pad2(a, rows, cols):
    return jnp.pad(a, ((0, rows - a.shape[0]), (0, cols - a.shape[1])))


# ----------------------------- Pallas kernels ------------------------------ #

def _project_kernel(x_ref, w_ref, d_ref, o_ref):
    """XW projection with the right D^-1/2 folded in: (X @ W) * d_row."""
    xw = jnp.dot(x_ref[...], w_ref[...], preferred_element_type=jnp.float32)
    o_ref[...] = (xw * d_ref[...]).astype(o_ref.dtype)


def _aggregate_kernel(a_ref, xw_ref, dl_ref, b_ref, o_ref, acc_ref,
                      *, tk, resident, apply_relu):
    """Row/K-tiled (A+I)_int8 @ XW with f32 accumulator.

    Epilogue applies the left D^-1/2 scale, bias and (optionally) ReLU.
    When `resident`, xw_ref holds the full (n_pad, f_out) array in VMEM and the
    k-slab is selected in-kernel; otherwise xw_ref is the streamed k-block.
    """
    k = pl.program_id(1)

    @pl.when(k == 0)
    def _():
        acc_ref[...] = jnp.zeros_like(acc_ref)

    if resident:
        off = pl.multiple_of(k * tk, tk)
        xw_blk = xw_ref[pl.ds(off, tk), :]
    else:
        xw_blk = xw_ref[...]

    acc_ref[...] += jnp.dot(a_ref[...].astype(jnp.bfloat16), xw_blk,
                            preferred_element_type=jnp.float32)

    @pl.when(k == pl.num_programs(1) - 1)
    def _():
        r = acc_ref[...] * dl_ref[...] + b_ref[...]
        if apply_relu:
            r = jnp.maximum(r, 0.0)
        o_ref[...] = r.astype(o_ref.dtype)


def _linear_kernel(x_ref, w_ref, b_ref, o_ref):
    """Final readout Linear: X @ W + b (row-block tiled)."""
    o_ref[...] = (
        jnp.dot(x_ref[...], w_ref[...], preferred_element_type=jnp.float32)
        + b_ref[...]
    ).astype(o_ref.dtype)


# ----------------------------- pallas_call wrappers ------------------------ #

def project(x, w, d, *, tm):
    n_pad, f_in = x.shape
    f_out = w.shape[1]
    return pl.pallas_call(
        _project_kernel,
        out_shape=jax.ShapeDtypeStruct((n_pad, f_out), jnp.bfloat16),
        grid=(n_pad // tm,),
        in_specs=[
            pl.BlockSpec((tm, f_in), lambda i: (i, 0)),
            pl.BlockSpec((f_in, f_out), lambda i: (0, 0)),
            pl.BlockSpec((tm, 1), lambda i: (i, 0)),
        ],
        out_specs=pl.BlockSpec((tm, f_out), lambda i: (i, 0)),
        compiler_params=pltpu.CompilerParams(
            dimension_semantics=("parallel",),
            vmem_limit_bytes=_VMEM_LIMIT),
    )(x, w, d)


def aggregate(a_int8, xw, d, b, *, apply_relu, tm, tk):
    n_pad = a_int8.shape[0]
    f_out = xw.shape[1]

    # Keep XW fully resident in VMEM when (double-buffered) it fits the budget.
    resident = (2 * n_pad * f_out * 2) <= _RESIDENT_XW_BUDGET
    if resident:
        xw_spec = pl.BlockSpec((n_pad, f_out), lambda i, k: (0, 0))
    else:
        xw_spec = pl.BlockSpec((tk, f_out), lambda i, k: (k, 0))

    kern = functools.partial(_aggregate_kernel, tk=tk, resident=resident,
                             apply_relu=apply_relu)
    return pl.pallas_call(
        kern,
        out_shape=jax.ShapeDtypeStruct((n_pad, f_out), jnp.bfloat16),
        grid=(n_pad // tm, n_pad // tk),
        in_specs=[
            pl.BlockSpec((tm, tk), lambda i, k: (i, k)),   # stream int8 (A+I) tiles
            xw_spec,                                       # resident or streamed XW
            pl.BlockSpec((tm, 1), lambda i, k: (i, 0)),    # left D^-1/2 (row block)
            pl.BlockSpec((1, f_out), lambda i, k: (0, 0)),  # bias (resident)
        ],
        out_specs=pl.BlockSpec((tm, f_out), lambda i, k: (i, 0)),
        scratch_shapes=[pltpu.VMEM((tm, f_out), jnp.float32)],
        compiler_params=pltpu.CompilerParams(
            dimension_semantics=("parallel", "arbitrary"),
            vmem_limit_bytes=_VMEM_LIMIT),
    )(a_int8, xw, d, b)


def linear(x, w, b, *, tm):
    n_pad, f_in = x.shape
    f_out = w.shape[1]
    return pl.pallas_call(
        _linear_kernel,
        out_shape=jax.ShapeDtypeStruct((n_pad, f_out), jnp.float32),
        grid=(n_pad // tm,),
        in_specs=[
            pl.BlockSpec((tm, f_in), lambda i: (i, 0)),
            pl.BlockSpec((f_in, f_out), lambda i: (0, 0)),
            pl.BlockSpec((1, f_out), lambda i: (0, 0)),
        ],
        out_specs=pl.BlockSpec((tm, f_out), lambda i: (i, 0)),
        compiler_params=pltpu.CompilerParams(
            dimension_semantics=("parallel",),
            vmem_limit_bytes=_VMEM_LIMIT),
    )(x, w, b)


# ------------------------------ Model (glue) ------------------------------- #

def preprocess_graph(edge_index, num_nodes):
    """Build the factored normalization ONCE per graph (hoisted out of the hot
    path): padded int8 (A+I) counts and the padded D^-1/2 column vector.

    A_hat @ Z == d[:,None] * ((A+I) @ (d[:,None] * Z))  with d = deg^-1/2.
    Matches the original semantics: duplicate edges accumulate, plus eye.
    """
    src, dst = edge_index[0], edge_index[1]
    a = jnp.zeros((num_nodes, num_nodes), dtype=jnp.int32)
    a = a.at[dst, src].add(1)                        # aggregate src -> dst rows
    a = a + jnp.eye(num_nodes, dtype=jnp.int32)      # self-loops
    deg = jnp.sum(a, axis=1).astype(jnp.float32)
    d_inv_sqrt = jnp.where(deg > 0, jax.lax.rsqrt(deg), 0.0)

    n_pad, _, _ = _plan_tiles(num_nodes)
    a_pad = _pad2(a, n_pad, n_pad).astype(jnp.int8)  # binary-ish counts, 1 B/entry
    d_pad = jnp.pad(d_inv_sqrt, (0, n_pad - num_nodes)).reshape(n_pad, 1)
    return a_pad, d_pad
    # TODO(synk): long-term, replace dense (A+I) with CSR + PrefetchScalarGridSpec gather.


def init_params(key, in_channels, hidden_channels, num_layers, out_channels):
    """Deterministic (seeded) parameter init, mirroring module __init__ shapes."""
    params = {"convs": []}
    fan_in = in_channels
    for _ in range(num_layers):
        key, kw = jax.random.split(key)
        scale = 1.0 / jnp.sqrt(jnp.float32(fan_in))
        w = jax.random.uniform(kw, (fan_in, hidden_channels),
                               minval=-scale, maxval=scale, dtype=jnp.float32)
        b = jnp.zeros((1, hidden_channels), dtype=jnp.float32)
        params["convs"].append((w, b))
        fan_in = hidden_channels
    # self.lin = Linear(in_channels_after_convs, out_channels)
    key, kw, kb = jax.random.split(key, 3)
    scale = 1.0 / jnp.sqrt(jnp.float32(fan_in))
    params["lin_w"] = jax.random.uniform(kw, (fan_in, out_channels),
                                         minval=-scale, maxval=scale,
                                         dtype=jnp.float32)
    params["lin_b"] = jax.random.uniform(kb, (1, out_channels),
                                         minval=-scale, maxval=scale,
                                         dtype=jnp.float32)
    return params


def gnn_basic_apply(params, x, a_pad, d_pad):
    """Hot path: forward pass given the cached/preprocessed graph tensors."""
    n, f_in = x.shape
    n_pad, tm, tk = _plan_tiles(n)

    # Node features, zero-padded to lane-dense width, bf16 operands.
    h = _pad2(x.astype(jnp.float32), n_pad, _round_up(f_in, LANE)).astype(jnp.bfloat16)

    for (w, b) in params["convs"]:
        fi, fo = w.shape
        w_pad = _pad2(w, _round_up(fi, LANE), _round_up(fo, LANE)).astype(jnp.bfloat16)
        b_pad = _pad2(b, 1, _round_up(fo, LANE))                 # bias stays f32
        xw = project(h, w_pad, d_pad, tm=tm)                     # (X@W) * D^-1/2, once
        h = aggregate(a_pad, xw, d_pad, b_pad, apply_relu=True,  # conv -> ReLU fused
                      tm=tm, tk=tk)
        # dropout(p=0.0) == identity

    # readout = identity(x, batch) -> unchanged
    fi, fo = params["lin_w"].shape
    w_pad = _pad2(params["lin_w"], _round_up(fi, LANE), _round_up(fo, LANE)
                  ).astype(jnp.bfloat16)
    b_pad = _pad2(params["lin_b"], 1, _round_up(fo, LANE))
    out_pad = linear(h, w_pad, b_pad, tm=tm)
    return out_pad[:n, :fo]


def gnn_basic_forward(params, x, edge_index, batch=None):
    """Convenience wrapper matching the module signature (rebuilds the graph)."""
    a_pad, d_pad = preprocess_graph(edge_index, x.shape[0])
    return gnn_basic_apply(params, x, a_pad, d_pad)


# --------------------------------- Driver ---------------------------------- #

if __name__ == "__main__":
    key = jax.random.PRNGKey(0)

    num_nodes = 16
    in_channels = 8
    hidden_channels = 32
    out_channels = 16
    num_layers = 2
    num_edges = 32

    k_x, k_e, k_p = jax.random.split(key, 3)
    x = jax.random.normal(k_x, (num_nodes, in_channels), dtype=jnp.float32)
    edge_index = jax.random.randint(k_e, (2, num_edges), 0, num_nodes,
                                    dtype=jnp.int32)
    batch = jnp.zeros((num_nodes,), dtype=jnp.int32)  # single graph (identity readout)

    params = init_params(k_p, in_channels, hidden_channels, num_layers,
                         out_channels)

    # Graph preprocessing hoisted out of the per-call hot path (built once).
    a_pad, d_pad = preprocess_graph(edge_index, num_nodes)
    a_pad = jax.block_until_ready(a_pad)

    fwd = jax.jit(functools.partial(gnn_basic_apply, params))
    out = fwd(x, a_pad, d_pad)
    out = jax.block_until_ready(out)

    assert out.shape == (num_nodes, out_channels)
    assert out.dtype == jnp.float32
    print("KERNEL_OK")
</pallas_src>

<mosaic_0001>
module attributes {stable_mosaic.version = 11 : i64} {
  func.func @_aggregate_kernel(%arg0: i32, %arg1: i32, %arg2: memref<128x128xi8, #tpu.memory_space<vmem>>, %arg3: memref<128x128xbf16, #tpu.memory_space<vmem>>, %arg4: memref<128x1xf32, #tpu.memory_space<vmem>>, %arg5: memref<1x128xf32, #tpu.memory_space<vmem>>, %arg6: memref<128x128xbf16, #tpu.memory_space<vmem>>, %arg7: memref<128x128xf32, #tpu.memory_space<vmem>>) attributes {dimension_semantics = [#tpu.dimension_semantics<parallel>, #tpu.dimension_semantics<arbitrary>], iteration_bounds = array<i64: 1, 1>, scalar_prefetch = 0 : i64, scratch_operands = 1 : i64, tpu.core_type = #tpu.core_type<tc>, window_params = [{transform_indices = @transform_0, window_bounds = array<i64: 128, 128>}, {pipeline_mode = #tpu.pipeline_mode<synchronous>, transform_indices = @transform_1, window_bounds = array<i64: 128, 128>}, {transform_indices = @transform_2, window_bounds = array<i64: 128, 1>}, {pipeline_mode = #tpu.pipeline_mode<synchronous>, transform_indices = @transform_3, window_bounds = array<i64: 1, 128>}, {transform_indices = @transform_4, window_bounds = array<i64: 128, 128>}]} {
    %c0_i32 = arith.constant 0 : i32
    %0 = arith.cmpi eq, %arg1, %c0_i32 : i32
    %1 = arith.extui %0 : i1 to i32
    %c0_i32_0 = arith.constant 0 : i32
    %2 = arith.cmpi ne, %1, %c0_i32_0 : i32
    scf.if %2 {
      %cst_9 = arith.constant 0.000000e+00 : f32
      %16 = vector.broadcast %cst_9 : f32 to vector<128x128xf32>
      %c0_10 = arith.constant 0 : index
      %c0_11 = arith.constant 0 : index
      %17 = vector.load %arg7[%c0_10, %c0_11] : memref<128x128xf32, #tpu.memory_space<vmem>>, vector<128x128xf32>
      tpu.vector_store %arg7[%c0_10, %c0_11], %16 {strides = array<i32>} : memref<128x128xf32, #tpu.memory_space<vmem>>, vector<128x128xf32>,
    } else {
    }
    %c128_i32 = arith.constant 128 : i32
    %3 = arith.muli %arg1, %c128_i32 : i32
    %4 = tpu.assume_multiple %3, 128 : i32
    %5 = arith.index_cast %4 : i32 to index
    %c0 = arith.constant 0 : index
    %6 = vector.load %arg3[%5, %c0] : memref<128x128xbf16, #tpu.memory_space<vmem>>, vector<128x128xbf16>
    %c0_1 = arith.constant 0 : index
    %c0_2 = arith.constant 0 : index
    %7 = vector.load %arg7[%c0_1, %c0_2] : memref<128x128xf32, #tpu.memory_space<vmem>>, vector<128x128xf32>
    %c0_3 = arith.constant 0 : index
    %c0_4 = arith.constant 0 : index
    %8 = vector.load %arg2[%c0_3, %c0_4] : memref<128x128xi8, #tpu.memory_space<vmem>>, vector<128x128xi8>
    %9 = arith.sitofp %8 : vector<128x128xi8> to vector<128x128xbf16>
    %cst = arith.constant dense<0.000000e+00> : vector<128x128xf32>
    %10 = tpu.matmul %9, %6, %cst {dimension_numbers = #tpu.dot_dimension_numbers<[1], [0], [0], [1], [0, 0, 1, 1], [], []>} : vector<128x128xbf16>, vector<128x128xbf16>, vector<128x128xf32> -> vector<128x128xf32>
    %11 = arith.addf %7, %10 : vector<128x128xf32>
    %c0_5 = arith.constant 0 : index
    %c0_6 = arith.constant 0 : index
    %12 = vector.load %arg7[%c0_5, %c0_6] : memref<128x128xf32, #tpu.memory_space<vmem>>, vector<128x128xf32>
    tpu.vector_store %arg7[%c0_5, %c0_6], %11 {strides = array<i32>} : memref<128x128xf32, #tpu.memory_space<vmem>>, vector<128x128xf32>,
    %c0_i32_7 = arith.constant 0 : i32
    %13 = arith.cmpi eq, %arg1, %c0_i32_7 : i32
    %14 = arith.extui %13 : i1 to i32
    %c0_i32_8 = arith.constant 0 : i32
    %15 = arith.cmpi ne, %14, %c0_i32_8 : i32
    scf.if %15 {
      %c0_9 = arith.constant 0 : index
      %c0_10 = arith.constant 0 : index
      %16 = vector.load %arg7[%c0_9, %c0_10] : memref<128x128xf32, #tpu.memory_space<vmem>>, vector<128x128xf32>
      %c0_11 = arith.constant 0 : index
      %c0_12 = arith.constant 0 : index
      %17 = vector.load %arg4[%c0_11, %c0_12] : memref<128x1xf32, #tpu.memory_space<vmem>>, vector<128x1xf32>
      %18 = vector.broadcast %17 : vector<128x1xf32> to vector<128x128xf32>
      %19 = arith.mulf %16, %18 : vector<128x128xf32>
      %c0_13 = arith.constant 0 : index
      %c0_14 = arith.constant 0 : index
      %20 = vector.load %arg5[%c0_13, %c0_14] : memref<1x128xf32, #tpu.memory_space<vmem>>, vector<1x128xf32>
      %21 = vector.broadcast %20 : vector<1x128xf32> to vector<128x128xf32>
      %22 = arith.addf %19, %21 : vector<128x128xf32>
      %cst_15 = arith.constant 0.000000e+00 : f32
      %23 = vector.broadcast %cst_15 : f32 to vector<128x128xf32>
      %24 = arith.maximumf %22, %23 : vector<128x128xf32>
      %25 = arith.truncf %24 : vector<128x128xf32> to vector<128x128xbf16>
      %c0_16 = arith.constant 0 : index
      %c0_17 = arith.constant 0 : index
      %26 = vector.load %arg6[%c0_16, %c0_17] : memref<128x128xbf16, #tpu.memory_space<vmem>>, vector<128x128xbf16>
      tpu.vector_store %arg6[%c0_16, %c0_17], %25 {strides = array<i32>} : memref<128x128xbf16, #tpu.memory_space<vmem>>, vector<128x128xbf16>,
    } else {
    }
    return
  }
  func.func @transform_0(%arg0: i32, %arg1: i32) -> (i32, i32) {
    %c0_i32 = arith.constant 0 : i32
    return %arg0, %arg1 : i32, i32
  }
  func.func @transform_1(%arg0: i32, %arg1: i32) -> (i32, i32) {
    %c0_i32 = arith.constant 0 : i32
    %c0_i32_0 = arith.constant 0 : i32
    %c0_i32_1 = arith.constant 0 : i32
    return %c0_i32, %c0_i32_0 : i32, i32
  }
  func.func @transform_2(%arg0: i32, %arg1: i32) -> (i32, i32) {
    %c0_i32 = arith.constant 0 : i32
    %c0_i32_0 = arith.constant 0 : i32
    return %arg0, %c0_i32 : i32, i32
  }
  func.func @transform_3(%arg0: i32, %arg1: i32) -> (i32, i32) {
    %c0_i32 = arith.constant 0 : i32
    %c0_i32_0 = arith.constant 0 : i32
    %c0_i32_1 = arith.constant 0 : i32
    return %c0_i32, %c0_i32_0 : i32, i32
  }
  func.func @transform_4(%arg0: i32, %arg1: i32) -> (i32, i32) {
    %c0_i32 = arith.constant 0 : i32
    %c0_i32_0 = arith.constant 0 : i32
    return %arg0, %c0_i32 : i32, i32
  }
}

module attributes {stable_mosaic.version = 11 : i64} {
  func.func @_project_kernel(%arg0: i32, %arg1: memref<128x128xbf16, #tpu.memory_space<vmem>>, %arg2: memref<128x128xbf16, #tpu.memory_space<vmem>>, %arg3: memref<128x1xf32, #tpu.memory_space<vmem>>, %arg4: memref<128x128xbf16, #tpu.memory_space<vmem>>) attributes {dimension_semantics = [#tpu.dimension_semantics<parallel>], iteration_bounds = array<i64: 1>, scalar_prefetch = 0 : i64, scratch_operands = 0 : i64, tpu.core_type = #tpu.core_type<tc>, window_params = [{transform_indices = @transform_0, window_bounds = array<i64: 128, 128>}, {pipeline_mode = #tpu.pipeline_mode<synchronous>, transform_indices = @transform_1, window_bounds = array<i64: 128, 128>}, {transform_indices = @transform_2, window_bounds = array<i64: 128, 1>}, {transform_indices = @transform_3, window_bounds = array<i64: 128, 128>}]} {
    %c0 = arith.constant 0 : index
    %c0_0 = arith.constant 0 : index
    %0 = vector.load %arg1[%c0, %c0_0] : memref<128x128xbf16, #tpu.memory_space<vmem>>, vector<128x128xbf16>
    %c0_1 = arith.constant 0 : index
    %c0_2 = arith.constant 0 : index
    %1 = vector.load %arg2[%c0_1, %c0_2] : memref<128x128xbf16, #tpu.memory_space<vmem>>, vector<128x128xbf16>
    %cst = arith.constant dense<0.000000e+00> : vector<128x128xf32>
    %2 = tpu.matmul %0, %1, %cst {dimension_numbers = #tpu.dot_dimension_numbers<[1], [0], [0], [1], [0, 0, 1, 1], [], []>} : vector<128x128xbf16>, vector<128x128xbf16>, vector<128x128xf32> -> vector<128x128xf32>
    %c0_3 = arith.constant 0 : index
    %c0_4 = arith.constant 0 : index
    %3 = vector.load %arg3[%c0_3, %c0_4] : memref<128x1xf32, #tpu.memory_space<vmem>>, vector<128x1xf32>
    %4 = vector.broadcast %3 : vector<128x1xf32> to vector<128x128xf32>
    %5 = arith.mulf %2, %4 : vector<128x128xf32>
    %6 = arith.truncf %5 : vector<128x128xf32> to vector<128x128xbf16>
    %c0_5 = arith.constant 0 : index
    %c0_6 = arith.constant 0 : index
    %7 = vector.load %arg4[%c0_5, %c0_6] : memref<128x128xbf16, #tpu.memory_space<vmem>>, vector<128x128xbf16>
    tpu.vector_store %arg4[%c0_5, %c0_6], %6 {strides = array<i32>} : memref<128x128xbf16, #tpu.memory_space<vmem>>, vector<128x128xbf16>,
    return
  }
  func.func @transform_0(%arg0: i32) -> (i32, i32) {
    %c0_i32 = arith.constant 0 : i32
    %c0_i32_0 = arith.constant 0 : i32
    return %arg0, %c0_i32 : i32, i32
  }
  func.func @transform_1(%arg0: i32) -> (i32, i32) {
    %c0_i32 = arith.constant 0 : i32
    %c0_i32_0 = arith.constant 0 : i32
    %c0_i32_1 = arith.constant 0 : i32
    return %c0_i32, %c0_i32_0 : i32, i32
  }
  func.func @transform_2(%arg0: i32) -> (i32, i32) {
    %c0_i32 = arith.constant 0 : i32
    %c0_i32_0 = arith.constant 0 : i32
    return %arg0, %c0_i32 : i32, i32
  }
  func.func @transform_3(%arg0: i32) -> (i32, i32) {
    %c0_i32 = arith.constant 0 : i32
    %c0_i32_0 = arith.constant 0 : i32
    return %arg0, %c0_i32 : i32, i32
  }
}

module attributes {stable_mosaic.version = 11 : i64} {
  func.func @_linear_kernel(%arg0: i32, %arg1: memref<128x128xbf16, #tpu.memory_space<vmem>>, %arg2: memref<128x128xbf16, #tpu.memory_space<vmem>>, %arg3: memref<1x128xf32, #tpu.memory_space<vmem>>, %arg4: memref<128x128xf32, #tpu.memory_space<vmem>>) attributes {dimension_semantics = [#tpu.dimension_semantics<parallel>], iteration_bounds = array<i64: 1>, scalar_prefetch = 0 : i64, scratch_operands = 0 : i64, tpu.core_type = #tpu.core_type<tc>, window_params = [{transform_indices = @transform_0, window_bounds = array<i64: 128, 128>}, {pipeline_mode = #tpu.pipeline_mode<synchronous>, transform_indices = @transform_1, window_bounds = array<i64: 128, 128>}, {pipeline_mode = #tpu.pipeline_mode<synchronous>, transform_indices = @transform_2, window_bounds = array<i64: 1, 128>}, {transform_indices = @transform_3, window_bounds = array<i64: 128, 128>}]} {
    %c0 = arith.constant 0 : index
    %c0_0 = arith.constant 0 : index
    %0 = vector.load %arg1[%c0, %c0_0] : memref<128x128xbf16, #tpu.memory_space<vmem>>, vector<128x128xbf16>
    %c0_1 = arith.constant 0 : index
    %c0_2 = arith.constant 0 : index
    %1 = vector.load %arg2[%c0_1, %c0_2] : memref<128x128xbf16, #tpu.memory_space<vmem>>, vector<128x128xbf16>
    %cst = arith.constant dense<0.000000e+00> : vector<128x128xf32>
    %2 = tpu.matmul %0, %1, %cst {dimension_numbers = #tpu.dot_dimension_numbers<[1], [0], [0], [1], [0, 0, 1, 1], [], []>} : vector<128x128xbf16>, vector<128x128xbf16>, vector<128x128xf32> -> vector<128x128xf32>
    %c0_3 = arith.constant 0 : index
    %c0_4 = arith.constant 0 : index
    %3 = vector.load %arg3[%c0_3, %c0_4] : memref<1x128xf32, #tpu.memory_space<vmem>>, vector<1x128xf32>
    %4 = vector.broadcast %3 : vector<1x128xf32> to vector<128x128xf32>
    %5 = arith.addf %2, %4 : vector<128x128xf32>
    %c0_5 = arith.constant 0 : index
    %c0_6 = arith.constant 0 : index
    %6 = vector.load %arg4[%c0_5, %c0_6] : memref<128x128xf32, #tpu.memory_space<vmem>>, vector<128x128xf32>
    tpu.vector_store %arg4[%c0_5, %c0_6], %5 {strides = array<i32>} : memref<128x128xf32, #tpu.memory_space<vmem>>, vector<128x128xf32>,
    return
  }
  func.func @transform_0(%arg0: i32) -> (i32, i32) {
    %c0_i32 = arith.constant 0 : i32
    %c0_i32_0 = arith.constant 0 : i32
    return %arg0, %c0_i32 : i32, i32
  }
  func.func @transform_1(%arg0: i32) -> (i32, i32) {
    %c0_i32 = arith.constant 0 : i32
    %c0_i32_0 = arith.constant 0 : i32
    %c0_i32_1 = arith.constant 0 : i32
    return %c0_i32, %c0_i32_0 : i32, i32
  }
  func.func @transform_2(%arg0: i32) -> (i32, i32) {
    %c0_i32 = arith.constant 0 : i32
    %c0_i32_0 = arith.constant 0 : i32
    %c0_i32_1 = arith.constant 0 : i32
    return %c0_i32, %c0_i32_0 : i32, i32
  }
  func.func @transform_3(%arg0: i32) -> (i32, i32) {
    %c0_i32 = arith.constant 0 : i32
    %c0_i32_0 = arith.constant 0 : i32
    return %arg0, %c0_i32 : i32, i32
  }
}

</mosaic_0001>

<llo_original>
// kernel: gnn_basic_apply.6
$region0: #{gnn_basic_apply.6}
  #allocation0 [shape = 'u32[]', space=smem, size = 0x4, offset = 0x4, fixed_abs, tag = 'smem constant byte address 0x4 - core index']
  #allocation1 [shape = 'u32[72,128]{1,0:T(1,128)}', space=vmem, size = 0x9000, scoped, tag = 'internal scratch']
  #allocation2 [shape = 'f32[128,128]{1,0:T(8,128)}', space=vmem, size = 0x10000, scoped, tag = 'scratch operand']
  %s0 = inlined_call_operand.vmem [shape: s8[128,128], index: 0, kind: input, shape index: {}]
  %s1 = inlined_call_operand.vmem [shape: bf16[128,128], index: 1, kind: input, shape index: {}]
  %s2 = inlined_call_operand.vmem [shape: f32[128,1], index: 2, kind: input, shape index: {}]
  %s3 = inlined_call_operand.vmem [shape: f32[1,128], index: 3, kind: input, shape index: {}]
  %s4 = inlined_call_operand.vmem [shape: bf16[128,128], index: 4, kind: output, shape index: {}]
  %s5 = sld [smem:[#allocation0]]
  $region34: #{gnn_basic_apply.6} parent=0
    _
  %s7 = ssub.s32 1, %s5
  %s8 = scalar_select 0, %s7, %s5
  // Predicated region
  $region2: #{gnn_basic_apply.6} parent=0 // pred_check
    _
  $region3: #{gnn_basic_apply.6} parent=0 // pred_check_branch
    %10 = sbr.rel (0) target = $region5
  $region4: #{gnn_basic_apply.6} parent=0 // pred_region
    _
  $region5: #{gnn_basic_apply.6} parent=0 // pred_fallthru
    _
  // Predicated region
  $region6: #{gnn_basic_apply.6} parent=0 // pred_check
    _
  $region7: #{gnn_basic_apply.6} parent=0 // pred_check_branch
    %12 = sbr.rel (0) target = $region9
  $region8: #{gnn_basic_apply.6} parent=0 // pred_region
    _
  $region9: #{gnn_basic_apply.6} parent=0 // pred_fallthru
    _
  // Predicated region
  $region10: #{gnn_basic_apply.6} parent=0 // pred_check
    _
  $region11: #{gnn_basic_apply.6} parent=0 // pred_check_branch
    %14 = sbr.rel (0) target = $region13
  $region12: #{gnn_basic_apply.6} parent=0 // pred_region
    _
  $region13: #{gnn_basic_apply.6} parent=0 // pred_fallthru
    _
  // Predicated region
  $region14: #{gnn_basic_apply.6} parent=0 // pred_check
    _
  $region15: #{gnn_basic_apply.6} parent=0 // pred_check_branch
    %16 = sbr.rel (0) target = $region17
  $region16: #{gnn_basic_apply.6} parent=0 // pred_region
    _
  $region17: #{gnn_basic_apply.6} parent=0 // pred_fallthru
    _
  %p17 = scmp.eq.s32.totalorder 0, 0
  // Predicated region
  $region18: #{gnn_basic_apply.6} parent=0 // pred_check
    %p18 = pneg %p17
  $region19: #{gnn_basic_apply.6} parent=0 // pred_check_branch
    %20 = sbr.rel (%p18) target = $region21
  $region20: #{gnn_basic_apply.6} parent=0 // pred_region
    %21 = vst [vmem:[#allocation2] sm:$0xff] 0.0
    %22 = vst [vmem:[#allocation2 + $0x8] sm:$0xff] 0.0
    %23 = vst [vmem:[#allocation2 + $0x10] sm:$0xff] 0.0
    %24 = vst [vmem:[#allocation2 + $0x18] sm:$0xff] 0.0
    %25 = vst [vmem:[#allocation2 + $0x20] sm:$0xff] 0.0
    %26 = vst [vmem:[#allocation2 + $0x28] sm:$0xff] 0.0
    %27 = vst [vmem:[#allocation2 + $0x30] sm:$0xff] 0.0
    %28 = vst [vmem:[#allocation2 + $0x38] sm:$0xff] 0.0
    %29 = vst [vmem:[#allocation2 + $0x40] sm:$0xff] 0.0
    %30 = vst [vmem:[#allocation2 + $0x48] sm:$0xff] 0.0
    %31 = vst [vmem:[#allocation2 + $0x50] sm:$0xff] 0.0
    %32 = vst [vmem:[#allocation2 + $0x58] sm:$0xff] 0.0
    %33 = vst [vmem:[#allocation2 + $0x60] sm:$0xff] 0.0
    %34 = vst [vmem:[#allocation2 + $0x68] sm:$0xff] 0.0
    %35 = vst [vmem:[#allocation2 + $0x70] sm:$0xff] 0.0
    %36 = vst [vmem:[#allocation2 + $0x78] sm:$0xff] 0.0
  $region21: #{gnn_basic_apply.6} parent=0 // pred_fallthru
    _
  %s37 = smul.u32 0, 128
  %s38 = sshra.s32 %s37, 3
  %s39 = sand.u32 %s37, 7
  %s40 = smul.addr %s38, 4
  %s41 = scalar_lea.vmem %s1, %s40
  %v42 = vld [vmem:[%s41] sm:$0xf]
  %v43 = vld [vmem:[%s41 + $0x4] sm:$0xf]
  %v44 = vld [vmem:[%s41 + $0x8] sm:$0xf]
  %v45 = vld [vmem:[%s41 + $0xc] sm:$0xf]
  %v46 = vld [vmem:[%s41 + $0x10] sm:$0xf]
  %v47 = vld [vmem:[%s41 + $0x14] sm:$0xf]
  %v48 = vld [vmem:[%s41 + $0x18] sm:$0xf]
  %v49 = vld [vmem:[%s41 + $0x1c] sm:$0xf]
  %v50 = vld [vmem:[%s41 + $0x20] sm:$0xf]
  %v51 = vld [vmem:[%s41 + $0x24] sm:$0xf]
  %v52 = vld [vmem:[%s41 + $0x28] sm:$0xf]
  %v53 = vld [vmem:[%s41 + $0x2c] sm:$0xf]
  %v54 = vld [vmem:[%s41 + $0x30] sm:$0xf]
  %v55 = vld [vmem:[%s41 + $0x34] sm:$0xf]
  %v56 = vld [vmem:[%s41 + $0x38] sm:$0xf]
  %v57 = vld [vmem:[%s41 + $0x3c] sm:$0xf]
  %v58 = vld [vmem:[#allocation2] sm:$0xff]
  %v59 = vld [vmem:[#allocation2 + $0x8] sm:$0xff]
  %v60 = vld [vmem:[#allocation2 + $0x10] sm:$0xff]
  %v61 = vld [vmem:[#allocation2 + $0x18] sm:$0xff]
  %v62 = vld [vmem:[#allocation2 + $0x20] sm:$0xff]
  %v63 = vld [vmem:[#allocation2 + $0x28] sm:$0xff]
  %v64 = vld [vmem:[#allocation2 + $0x30] sm:$0xff]
  %v65 = vld [vmem:[#allocation2 + $0x38] sm:$0xff]
  %v66 = vld [vmem:[#allocation2 + $0x40] sm:$0xff]
  %v67 = vld [vmem:[#allocation2 + $0x48] sm:$0xff]
  %v68 = vld [vmem:[#allocation2 + $0x50] sm:$0xff]
  %v69 = vld [vmem:[#allocation2 + $0x58] sm:$0xff]
  %v70 = vld [vmem:[#allocation2 + $0x60] sm:$0xff]
  %v71 = vld [vmem:[#allocation2 + $0x68] sm:$0xff]
  %v72 = vld [vmem:[#allocation2 + $0x70] sm:$0xff]
  %v73 = vld [vmem:[#allocation2 + $0x78] sm:$0xff]
  %v74 = vld [vmem:[%s0] sm:$0xff]
  %v75 = vld [vmem:[%s0 + $0x8] sm:$0xff]
  %v76 = vld [vmem:[%s0 + $0x10] sm:$0xff]
  %v77 = vld [vmem:[%s0 + $0x18] sm:$0xff]
  %v78 = vunpack.c.0.s8 %v74
  %v79 = vunpack.c.1.s8 %v74
  %v80 = vunpack.c.2.s8 %v74
  %v81 = vunpack.c.3.s8 %v74
  %v82 = vunpack.c.0.s8 %v75
  %v83 = vunpack.c.1.s8 %v75
  %v84 = vunpack.c.2.s8 %v75
  %v85 = vunpack.c.3.s8 %v75
  %v86 = vunpack.c.0.s8 %v76
  %v87 = vunpack.c.1.s8 %v76
  %v88 = vunpack.c.2.s8 %v76
  %v89 = vunpack.c.3.s8 %v76
  %v90 = vunpack.c.0.s8 %v77
  %v91 = vunpack.c.1.s8 %v77
  %v92 = vunpack.c.2.s8 %v77
  %v93 = vunpack.c.3.s8 %v77
  %v94 = vcvt.s32.f32 %v78
  %v95 = vcvt.s32.f32 %v79
  %v96 = vcvt.s32.f32 %v80
  %v97 = vcvt.s32.f32 %v81
  %v98 = vcvt.s32.f32 %v82
  %v99 = vcvt.s32.f32 %v83
  %v100 = vcvt.s32.f32 %v84
  %v101 = vcvt.s32.f32 %v85
  %v102 = vcvt.s32.f32 %v86
  %v103 = vcvt.s32.f32 %v87
  %v104 = vcvt.s32.f32 %v88
  %v105 = vcvt.s32.f32 %v89
  %v106 = vcvt.s32.f32 %v90
  %v107 = vcvt.s32.f32 %v91
  %v108 = vcvt.s32.f32 %v92
  %v109 = vcvt.s32.f32 %v93
  %v110 = vpack.c.bf16 %v95, %v94
  %v111 = vpack.c.bf16 %v97, %v96
  %v112 = vpack.c.bf16 %v99, %v98
  %v113 = vpack.c.bf16 %v101, %v100
  %v114 = vpack.c.bf16 %v103, %v102
  %v115 = vpack.c.bf16 %v105, %v104
  %v116 = vpack.c.bf16 %v107, %v106
  %v117 = vpack.c.bf16 %v109, %v108
  %v134 = vunpack.c.l.b16 %v42
  %v135 = vunpack.c.l.b16 %v43
  %v136 = vunpack.c.l.b16 %v44
  %v137 = vunpack.c.l.b16 %v45
  %v138 = vunpack.c.l.b16 %v46
  %v139 = vunpack.c.l.b16 %v47
  %v140 = vunpack.c.l.b16 %v48
  %v141 = vunpack.c.l.b16 %v49
  %v142 = vunpack.c.l.b16 %v50
  %v143 = vunpack.c.l.b16 %v51
  %v144 = vunpack.c.l.b16 %v52
  %v145 = vunpack.c.l.b16 %v53
  %v146 = vunpack.c.l.b16 %v54
  %v147 = vunpack.c.l.b16 %v55
  %v148 = vunpack.c.l.b16 %v56
  %v149 = vunpack.c.l.b16 %v57
  %v150 = vpack.c.b16 %v135, %v134
  %v151 = vpack.c.b16 %v137, %v136
  %v152 = vpack.c.b16 %v139, %v138
  %v153 = vpack.c.b16 %v141, %v140
  %v154 = vpack.c.b16 %v143, %v142
  %v155 = vpack.c.b16 %v145, %v144
  %v156 = vpack.c.b16 %v147, %v146
  %v157 = vpack.c.b16 %v149, %v148
  %166 = vmatpush.bf16.msra.mxu0 %v157
  %167 = vmatpush.bf16.msra.mxu0 %v156
  %168 = vmatpush.bf16.msra.mxu0 %v155
  %169 = vmatpush.bf16.msra.mxu0 %v154
  %170 = vmatpush.bf16.msra.mxu0 %v153
  %171 = vmatpush.bf16.msra.mxu0 %v152
  %172 = vmatpush.bf16.msra.mxu0 %v151
  %173 = vmatpush.bf16.msra.mxu0 %v150
  %174 = vmatmul.bf16.gmra.mxu0 %v110
  %v175 = vpop.f32.mrf.mxu0
  %v176 = vadd.f32 0.0, %v175
  %v177 = vpop.f32.mrf.mxu0
  %v178 = vadd.f32 0.0, %v177
  %179 = vmatmul.bf16.gmra.mxu0 %v111
  %v180 = vpop.f32.mrf.mxu0
  %v181 = vadd.f32 0.0, %v180
  %v182 = vpop.f32.mrf.mxu0
  %v183 = vadd.f32 0.0, %v182
  %184 = vmatmul.bf16.gmra.mxu0 %v112
  %v185 = vpop.f32.mrf.mxu0
  %v186 = vadd.f32 0.0, %v185
  %v187 = vpop.f32.mrf.mxu0
  %v188 = vadd.f32 0.0, %v187
  %189 = vmatmul.bf16.gmra.mxu0 %v113
  %v190 = vpop.f32.mrf.mxu0
  %v191 = vadd.f32 0.0, %v190
  %v192 = vpop.f32.mrf.mxu0
  %v193 = vadd.f32 0.0, %v192
  %194 = vmatmul.bf16.gmra.mxu0 %v114
  %v195 = vpop.f32.mrf.mxu0
  %v196 = vadd.f32 0.0, %v195
  %v197 = vpop.f32.mrf.mxu0
  %v198 = vadd.f32 0.0, %v197
  %199 = vmatmul.bf16.gmra.mxu0 %v115
  %v200 = vpop.f32.mrf.mxu0
  %v201 = vadd.f32 0.0, %v200
  %v202 = vpop.f32.mrf.mxu0
  %v203 = vadd.f32 0.0, %v202
  %204 = vmatmul.bf16.gmra.mxu0 %v116
  %v205 = vpop.f32.mrf.mxu0
  %v206 = vadd.f32 0.0, %v205
  %v207 = vpop.f32.mrf.mxu0
  %v208 = vadd.f32 0.0, %v207
  %209 = vmatmul.bf16.gmra.mxu0 %v117
  %v210 = vpop.f32.mrf.mxu0
  %v211 = vadd.f32 0.0, %v210
  %v212 = vpop.f32.mrf.mxu0
  %v213 = vadd.f32 0.0, %v212
  %214 = vdwg.mxu0
  %v215 = vadd.f32 %v58, %v176
  %v216 = vadd.f32 %v59, %v178
  %v217 = vadd.f32 %v60, %v181
  %v218 = vadd.f32 %v61, %v183
  %v219 = vadd.f32 %v62, %v186
  %v220 = vadd.f32 %v63, %v188
  %v221 = vadd.f32 %v64, %v191
  %v222 = vadd.f32 %v65, %v193
  %v223 = vadd.f32 %v66, %v196
  %v224 = vadd.f32 %v67, %v198
  %v225 = vadd.f32 %v68, %v201
  %v226 = vadd.f32 %v69, %v203
  %v227 = vadd.f32 %v70, %v206
  %v228 = vadd.f32 %v71, %v208
  %v229 = vadd.f32 %v72, %v211
  %v230 = vadd.f32 %v73, %v213
  %231 = vst [vmem:[#allocation2] sm:$0xff] %v215
  %232 = vst [vmem:[#allocation2 + $0x8] sm:$0xff] %v216
  %233 = vst [vmem:[#allocation2 + $0x10] sm:$0xff] %v217
  %234 = vst [vmem:[#allocation2 + $0x18] sm:$0xff] %v218
  %235 = vst [vmem:[#allocation2 + $0x20] sm:$0xff] %v219
  %236 = vst [vmem:[#allocation2 + $0x28] sm:$0xff] %v220
  %237 = vst [vmem:[#allocation2 + $0x30] sm:$0xff] %v221
  %238 = vst [vmem:[#allocation2 + $0x38] sm:$0xff] %v222
  %239 = vst [vmem:[#allocation2 + $0x40] sm:$0xff] %v223
  %240 = vst [vmem:[#allocation2 + $0x48] sm:$0xff] %v224
  %241 = vst [vmem:[#allocation2 + $0x50] sm:$0xff] %v225
  %242 = vst [vmem:[#allocation2 + $0x58] sm:$0xff] %v226
  %243 = vst [vmem:[#allocation2 + $0x60] sm:$0xff] %v227
  %244 = vst [vmem:[#allocation2 + $0x68] sm:$0xff] %v228
  %245 = vst [vmem:[#allocation2 + $0x70] sm:$0xff] %v229
  %246 = vst [vmem:[#allocation2 + $0x78] sm:$0xff] %v230
  // Predicated region
  $region22: #{gnn_basic_apply.6} parent=0 // pred_check
    %p247 = pneg %p17
  $region23: #{gnn_basic_apply.6} parent=0 // pred_check_branch
    %249 = sbr.rel (%p247) target = $region25
  $region24: #{gnn_basic_apply.6} parent=0 // pred_region
    %v250 = vld [vmem:[#allocation2] sm:$0xff]
    %v251 = vld [vmem:[#allocation2 + $0x8] sm:$0xff]
    %v252 = vld [vmem:[#allocation2 + $0x10] sm:$0xff]
    %v253 = vld [vmem:[#allocation2 + $0x18] sm:$0xff]
    %v254 = vld [vmem:[#allocation2 + $0x20] sm:$0xff]
    %v255 = vld [vmem:[#allocation2 + $0x28] sm:$0xff]
    %v256 = vld [vmem:[#allocation2 + $0x30] sm:$0xff]
    %v257 = vld [vmem:[#allocation2 + $0x38] sm:$0xff]
    %v258 = vld [vmem:[#allocation2 + $0x40] sm:$0xff]
    %v259 = vld [vmem:[#allocation2 + $0x48] sm:$0xff]
    %v260 = vld [vmem:[#allocation2 + $0x50] sm:$0xff]
    %v261 = vld [vmem:[#allocation2 + $0x58] sm:$0xff]
    %v262 = vld [vmem:[#allocation2 + $0x60] sm:$0xff]
    %v263 = vld [vmem:[#allocation2 + $0x68] sm:$0xff]
    %v264 = vld [vmem:[#allocation2 + $0x70] sm:$0xff]
    %v265 = vld [vmem:[#allocation2 + $0x78] sm:$0xff]
    %v266 = vld [vmem:[%s2] sm:$0xff]
    %v267 = vld [vmem:[%s2 + $0x8] sm:$0xff]
    %v268 = vld [vmem:[%s2 + $0x10] sm:$0xff]
    %v269 = vld [vmem:[%s2 + $0x18] sm:$0xff]
    %v270 = vld [vmem:[%s2 + $0x20] sm:$0xff]
    %v271 = vld [vmem:[%s2 + $0x28] sm:$0xff]
    %v272 = vld [vmem:[%s2 + $0x30] sm:$0xff]
    %v273 = vld [vmem:[%s2 + $0x38] sm:$0xff]
    %v274 = vld [vmem:[%s2 + $0x40] sm:$0xff]
    %v275 = vld [vmem:[%s2 + $0x48] sm:$0xff]
    %v276 = vld [vmem:[%s2 + $0x50] sm:$0xff]
    %v277 = vld [vmem:[%s2 + $0x58] sm:$0xff]
    %v278 = vld [vmem:[%s2 + $0x60] sm:$0xff]
    %v279 = vld [vmem:[%s2 + $0x68] sm:$0xff]
    %v280 = vld [vmem:[%s2 + $0x70] sm:$0xff]
    %v281 = vld [vmem:[%s2 + $0x78] sm:$0xff]
    %283 = vset.pattern.permute.xlu0 0
    %284 = vperm.xlu0 %283, %v266
    %v285 = vpop.permute.xlu0 %284
    %288 = vset.pattern.permute.xlu0 0
    %289 = vperm.xlu0 %288, %v267
    %v290 = vpop.permute.xlu0 %289
    %293 = vset.pattern.permute.xlu0 0
    %294 = vperm.xlu0 %293, %v268
    %v295 = vpop.permute.xlu0 %294
    %298 = vset.pattern.permute.xlu0 0
    %299 = vperm.xlu0 %298, %v269
    %v300 = vpop.permute.xlu0 %299
    %303 = vset.pattern.permute.xlu0 0
    %304 = vperm.xlu0 %303, %v270
    %v305 = vpop.permute.xlu0 %304
    %308 = vset.pattern.permute.xlu0 0
    %309 = vperm.xlu0 %308, %v271
    %v310 = vpop.permute.xlu0 %309
    %313 = vset.pattern.permute.xlu0 0
    %314 = vperm.xlu0 %313, %v272
    %v315 = vpop.permute.xlu0 %314
    %318 = vset.pattern.permute.xlu0 0
    %319 = vperm.xlu0 %318, %v273
    %v320 = vpop.permute.xlu0 %319
    %323 = vset.pattern.permute.xlu0 0
    %324 = vperm.xlu0 %323, %v274
    %v325 = vpop.permute.xlu0 %324
    %328 = vset.pattern.permute.xlu0 0
    %329 = vperm.xlu0 %328, %v275
    %v330 = vpop.permute.xlu0 %329
    %333 = vset.pattern.permute.xlu0 0
    %334 = vperm.xlu0 %333, %v276
    %v335 = vpop.permute.xlu0 %334
    %338 = vset.pattern.permute.xlu0 0
    %339 = vperm.xlu0 %338, %v277
    %v340 = vpop.permute.xlu0 %339
    %343 = vset.pattern.permute.xlu0 0
    %344 = vperm.xlu0 %343, %v278
    %v345 = vpop.permute.xlu0 %344
    %348 = vset.pattern.permute.xlu0 0
    %349 = vperm.xlu0 %348, %v279
    %v350 = vpop.permute.xlu0 %349
    %353 = vset.pattern.permute.xlu0 0
    %354 = vperm.xlu0 %353, %v280
    %v355 = vpop.permute.xlu0 %354
    %358 = vset.pattern.permute.xlu0 0
    %359 = vperm.xlu0 %358, %v281
    %v360 = vpop.permute.xlu0 %359
    %v362 = vmul.f32 %v250, %v285
    %v363 = vmul.f32 %v251, %v290
    %v364 = vmul.f32 %v252, %v295
    %v365 = vmul.f32 %v253, %v300
    %v366 = vmul.f32 %v254, %v305
    %v367 = vmul.f32 %v255, %v310
    %v368 = vmul.f32 %v256, %v315
    %v369 = vmul.f32 %v257, %v320
    %v370 = vmul.f32 %v258, %v325
    %v371 = vmul.f32 %v259, %v330
    %v372 = vmul.f32 %v260, %v335
    %v373 = vmul.f32 %v261, %v340
    %v374 = vmul.f32 %v262, %v345
    %v375 = vmul.f32 %v263, %v350
    %v376 = vmul.f32 %v264, %v355
    %v377 = vmul.f32 %v265, %v360
    %v378 = vld [vmem:[%s3] sm:$0x1]
    %v380 = vperm.slane %v378, 0
    %v382 = vadd.f32 %v362, %v380
    %v383 = vadd.f32 %v363, %v380
    %v384 = vadd.f32 %v364, %v380
    %v385 = vadd.f32 %v365, %v380
    %v386 = vadd.f32 %v366, %v380
    %v387 = vadd.f32 %v367, %v380
    %v388 = vadd.f32 %v368, %v380
    %v389 = vadd.f32 %v369, %v380
    %v390 = vadd.f32 %v370, %v380
    %v391 = vadd.f32 %v371, %v380
    %v392 = vadd.f32 %v372, %v380
    %v393 = vadd.f32 %v373, %v380
    %v394 = vadd.f32 %v374, %v380
    %v395 = vadd.f32 %v375, %v380
    %v396 = vadd.f32 %v376, %v380
    %v397 = vadd.f32 %v377, %v380
    %v398 = vmax.f32 %v382, 0.0
    %v399 = vmax.f32 %v383, 0.0
    %v400 = vmax.f32 %v384, 0.0
    %v401 = vmax.f32 %v385, 0.0
    %v402 = vmax.f32 %v386, 0.0
    %v403 = vmax.f32 %v387, 0.0
    %v404 = vmax.f32 %v388, 0.0
    %v405 = vmax.f32 %v389, 0.0
    %v406 = vmax.f32 %v390, 0.0
    %v407 = vmax.f32 %v391, 0.0
    %v408 = vmax.f32 %v392, 0.0
    %v409 = vmax.f32 %v393, 0.0
    %v410 = vmax.f32 %v394, 0.0
    %v411 = vmax.f32 %v395, 0.0
    %v412 = vmax.f32 %v396, 0.0
    %v413 = vmax.f32 %v397, 0.0
    %v414 = vpack.c.bf16 %v398, %v398
    %v415 = vpack.c.bf16 %v399, %v399
    %v416 = vpack.c.bf16 %v400, %v400
    %v417 = vpack.c.bf16 %v401, %v401
    %v418 = vpack.c.bf16 %v402, %v402
    %v419 = vpack.c.bf16 %v403, %v403
    %v420 = vpack.c.bf16 %v404, %v404
    %v421 = vpack.c.bf16 %v405, %v405
    %v422 = vpack.c.bf16 %v406, %v406
    %v423 = vpack.c.bf16 %v407, %v407
    %v424 = vpack.c.bf16 %v408, %v408
    %v425 = vpack.c.bf16 %v409, %v409
    %v426 = vpack.c.bf16 %v410, %v410
    %v427 = vpack.c.bf16 %v411, %v411
    %v428 = vpack.c.bf16 %v412, %v412
    %v429 = vpack.c.bf16 %v413, %v413
    %430 = vst [vmem:[%s4] sm:$0xf] %v414
    %431 = vst [vmem:[%s4 + $0x4] sm:$0xf] %v415
    %432 = vst [vmem:[%s4 + $0x8] sm:$0xf] %v416
    %433 = vst [vmem:[%s4 + $0xc] sm:$0xf] %v417
    %434 = vst [vmem:[%s4 + $0x10] sm:$0xf] %v418
    %435 = vst [vmem:[%s4 + $0x14] sm:$0xf] %v419
    %436 = vst [vmem:[%s4 + $0x18] sm:$0xf] %v420
    %437 = vst [vmem:[%s4 + $0x1c] sm:$0xf] %v421
    %438 = vst [vmem:[%s4 + $0x20] sm:$0xf] %v422
    %439 = vst [vmem:[%s4 + $0x24] sm:$0xf] %v423
    %440 = vst [vmem:[%s4 + $0x28] sm:$0xf] %v424
    %441 = vst [vmem:[%s4 + $0x2c] sm:$0xf] %v425
    %442 = vst [vmem:[%s4 + $0x30] sm:$0xf] %v426
    %443 = vst [vmem:[%s4 + $0x34] sm:$0xf] %v427
    %444 = vst [vmem:[%s4 + $0x38] sm:$0xf] %v428
    %445 = vst [vmem:[%s4 + $0x3c] sm:$0xf] %v429
  $region25: #{gnn_basic_apply.6} parent=0 // pred_fallthru
    _
  // Predicated region
  $region26: #{gnn_basic_apply.6} parent=0 // pred_check
    _
  $region27: #{gnn_basic_apply.6} parent=0 // pred_check_branch
    %447 = sbr.rel (0) target = $region29
  $region28: #{gnn_basic_apply.6} parent=0 // pred_region
    _
  $region29: #{gnn_basic_apply.6} parent=0 // pred_fallthru
    _
  // Predicated region
  $region30: #{gnn_basic_apply.6} parent=0 // pred_check
    _
  $region31: #{gnn_basic_apply.6} parent=0 // pred_check_branch
    %449 = sbr.rel (0) target = $region33
  $region32: #{gnn_basic_apply.6} parent=0 // pred_region
    _
  $region33: #{gnn_basic_apply.6} parent=0 // pred_fallthru
    _

// kernel: gnn_basic_apply.5
$region0: #{gnn_basic_apply.5}
  #allocation0 [shape = 'u32[]', space=smem, size = 0x4, offset = 0x4, fixed_abs, tag = 'smem constant byte address 0x4 - core index']
  #allocation1 [shape = 'u32[72,128]{1,0:T(1,128)}', space=vmem, size = 0x9000, scoped, tag = 'internal scratch']
  %s0 = inlined_call_operand.vmem [shape: bf16[128,128], index: 0, kind: input, shape index: {}]
  %s1 = inlined_call_operand.vmem [shape: bf16[128,128], index: 1, kind: input, shape index: {}]
  %s2 = inlined_call_operand.vmem [shape: f32[128,1], index: 2, kind: input, shape index: {}]
  %s3 = inlined_call_operand.vmem [shape: bf16[128,128], index: 3, kind: output, shape index: {}]
  %s4 = sld [smem:[#allocation0]]
  $region22: #{gnn_basic_apply.5} parent=0
    _
  %s6 = ssub.s32 1, %s4
  %s7 = scalar_select 0, %s6, %s4
  // Predicated region
  $region2: #{gnn_basic_apply.5} parent=0 // pred_check
    _
  $region3: #{gnn_basic_apply.5} parent=0 // pred_check_branch
    %9 = sbr.rel (0) target = $region5
  $region4: #{gnn_basic_apply.5} parent=0 // pred_region
    _
  $region5: #{gnn_basic_apply.5} parent=0 // pred_fallthru
    _
  // Predicated region
  $region6: #{gnn_basic_apply.5} parent=0 // pred_check
    _
  $region7: #{gnn_basic_apply.5} parent=0 // pred_check_branch
    %11 = sbr.rel (0) target = $region9
  $region8: #{gnn_basic_apply.5} parent=0 // pred_region
    _
  $region9: #{gnn_basic_apply.5} parent=0 // pred_fallthru
    _
  // Predicated region
  $region10: #{gnn_basic_apply.5} parent=0 // pred_check
    _
  $region11: #{gnn_basic_apply.5} parent=0 // pred_check_branch
    %13 = sbr.rel (0) target = $region13
  $region12: #{gnn_basic_apply.5} parent=0 // pred_region
    _
  $region13: #{gnn_basic_apply.5} parent=0 // pred_fallthru
    _
  %v14 = vld [vmem:[%s0] sm:$0xf]
  %v15 = vld [vmem:[%s0 + $0x4] sm:$0xf]
  %v16 = vld [vmem:[%s0 + $0x8] sm:$0xf]
  %v17 = vld [vmem:[%s0 + $0xc] sm:$0xf]
  %v18 = vld [vmem:[%s0 + $0x10] sm:$0xf]
  %v19 = vld [vmem:[%s0 + $0x14] sm:$0xf]
  %v20 = vld [vmem:[%s0 + $0x18] sm:$0xf]
  %v21 = vld [vmem:[%s0 + $0x1c] sm:$0xf]
  %v22 = vld [vmem:[%s0 + $0x20] sm:$0xf]
  %v23 = vld [vmem:[%s0 + $0x24] sm:$0xf]
  %v24 = vld [vmem:[%s0 + $0x28] sm:$0xf]
  %v25 = vld [vmem:[%s0 + $0x2c] sm:$0xf]
  %v26 = vld [vmem:[%s0 + $0x30] sm:$0xf]
  %v27 = vld [vmem:[%s0 + $0x34] sm:$0xf]
  %v28 = vld [vmem:[%s0 + $0x38] sm:$0xf]
  %v29 = vld [vmem:[%s0 + $0x3c] sm:$0xf]
  %v30 = vld [vmem:[%s1] sm:$0xf]
  %v31 = vld [vmem:[%s1 + $0x4] sm:$0xf]
  %v32 = vld [vmem:[%s1 + $0x8] sm:$0xf]
  %v33 = vld [vmem:[%s1 + $0xc] sm:$0xf]
  %v34 = vld [vmem:[%s1 + $0x10] sm:$0xf]
  %v35 = vld [vmem:[%s1 + $0x14] sm:$0xf]
  %v36 = vld [vmem:[%s1 + $0x18] sm:$0xf]
  %v37 = vld [vmem:[%s1 + $0x1c] sm:$0xf]
  %v38 = vld [vmem:[%s1 + $0x20] sm:$0xf]
  %v39 = vld [vmem:[%s1 + $0x24] sm:$0xf]
  %v40 = vld [vmem:[%s1 + $0x28] sm:$0xf]
  %v41 = vld [vmem:[%s1 + $0x2c] sm:$0xf]
  %v42 = vld [vmem:[%s1 + $0x30] sm:$0xf]
  %v43 = vld [vmem:[%s1 + $0x34] sm:$0xf]
  %v44 = vld [vmem:[%s1 + $0x38] sm:$0xf]
  %v45 = vld [vmem:[%s1 + $0x3c] sm:$0xf]
  %v62 = vunpack.c.l.b16 %v14
  %v63 = vunpack.c.l.b16 %v15
  %v64 = vunpack.c.l.b16 %v16
  %v65 = vunpack.c.l.b16 %v17
  %v66 = vunpack.c.l.b16 %v18
  %v67 = vunpack.c.l.b16 %v19
  %v68 = vunpack.c.l.b16 %v20
  %v69 = vunpack.c.l.b16 %v21
  %v70 = vunpack.c.l.b16 %v22
  %v71 = vunpack.c.l.b16 %v23
  %v72 = vunpack.c.l.b16 %v24
  %v73 = vunpack.c.l.b16 %v25
  %v74 = vunpack.c.l.b16 %v26
  %v75 = vunpack.c.l.b16 %v27
  %v76 = vunpack.c.l.b16 %v28
  %v77 = vunpack.c.l.b16 %v29
  %v78 = vpack.c.b16 %v63, %v62
  %v79 = vpack.c.b16 %v65, %v64
  %v80 = vpack.c.b16 %v67, %v66
  %v81 = vpack.c.b16 %v69, %v68
  %v82 = vpack.c.b16 %v71, %v70
  %v83 = vpack.c.b16 %v73, %v72
  %v84 = vpack.c.b16 %v75, %v74
  %v85 = vpack.c.b16 %v77, %v76
  %v110 = vunpack.c.l.b16 %v30
  %v111 = vunpack.c.l.b16 %v31
  %v112 = vunpack.c.l.b16 %v32
  %v113 = vunpack.c.l.b16 %v33
  %v114 = vunpack.c.l.b16 %v34
  %v115 = vunpack.c.l.b16 %v35
  %v116 = vunpack.c.l.b16 %v36
  %v117 = vunpack.c.l.b16 %v37
  %v118 = vunpack.c.l.b16 %v38
  %v119 = vunpack.c.l.b16 %v39
  %v120 = vunpack.c.l.b16 %v40
  %v121 = vunpack.c.l.b16 %v41
  %v122 = vunpack.c.l.b16 %v42
  %v123 = vunpack.c.l.b16 %v43
  %v124 = vunpack.c.l.b16 %v44
  %v125 = vunpack.c.l.b16 %v45
  %v126 = vpack.c.b16 %v111, %v110
  %v127 = vpack.c.b16 %v113, %v112
  %v128 = vpack.c.b16 %v115, %v114
  %v129 = vpack.c.b16 %v117, %v116
  %v130 = vpack.c.b16 %v119, %v118
  %v131 = vpack.c.b16 %v121, %v120
  %v132 = vpack.c.b16 %v123, %v122
  %v133 = vpack.c.b16 %v125, %v124
  %142 = vmatpush.bf16.msra.mxu0 %v133
  %143 = vmatpush.bf16.msra.mxu0 %v132
  %144 = vmatpush.bf16.msra.mxu0 %v131
  %145 = vmatpush.bf16.msra.mxu0 %v130
  %146 = vmatpush.bf16.msra.mxu0 %v129
  %147 = vmatpush.bf16.msra.mxu0 %v128
  %148 = vmatpush.bf16.msra.mxu0 %v127
  %149 = vmatpush.bf16.msra.mxu0 %v126
  %150 = vmatmul.bf16.gmra.mxu0 %v78
  %v151 = vpop.f32.mrf.mxu0
  %v152 = vadd.f32 0.0, %v151
  %v153 = vpop.f32.mrf.mxu0
  %v154 = vadd.f32 0.0, %v153
  %155 = vmatmul.bf16.gmra.mxu0 %v79
  %v156 = vpop.f32.mrf.mxu0
  %v157 = vadd.f32 0.0, %v156
  %v158 = vpop.f32.mrf.mxu0
  %v159 = vadd.f32 0.0, %v158
  %160 = vmatmul.bf16.gmra.mxu0 %v80
  %v161 = vpop.f32.mrf.mxu0
  %v162 = vadd.f32 0.0, %v161
  %v163 = vpop.f32.mrf.mxu0
  %v164 = vadd.f32 0.0, %v163
  %165 = vmatmul.bf16.gmra.mxu0 %v81
  %v166 = vpop.f32.mrf.mxu0
  %v167 = vadd.f32 0.0, %v166
  %v168 = vpop.f32.mrf.mxu0
  %v169 = vadd.f32 0.0, %v168
  %170 = vmatmul.bf16.gmra.mxu0 %v82
  %v171 = vpop.f32.mrf.mxu0
  %v172 = vadd.f32 0.0, %v171
  %v173 = vpop.f32.mrf.mxu0
  %v174 = vadd.f32 0.0, %v173
  %175 = vmatmul.bf16.gmra.mxu0 %v83
  %v176 = vpop.f32.mrf.mxu0
  %v177 = vadd.f32 0.0, %v176
  %v178 = vpop.f32.mrf.mxu0
  %v179 = vadd.f32 0.0, %v178
  %180 = vmatmul.bf16.gmra.mxu0 %v84
  %v181 = vpop.f32.mrf.mxu0
  %v182 = vadd.f32 0.0, %v181
  %v183 = vpop.f32.mrf.mxu0
  %v184 = vadd.f32 0.0, %v183
  %185 = vmatmul.bf16.gmra.mxu0 %v85
  %v186 = vpop.f32.mrf.mxu0
  %v187 = vadd.f32 0.0, %v186
  %v188 = vpop.f32.mrf.mxu0
  %v189 = vadd.f32 0.0, %v188
  %190 = vdwg.mxu0
  %v191 = vld [vmem:[%s2] sm:$0xff]
  %v192 = vld [vmem:[%s2 + $0x8] sm:$0xff]
  %v193 = vld [vmem:[%s2 + $0x10] sm:$0xff]
  %v194 = vld [vmem:[%s2 + $0x18] sm:$0xff]
  %v195 = vld [vmem:[%s2 + $0x20] sm:$0xff]
  %v196 = vld [vmem:[%s2 + $0x28] sm:$0xff]
  %v197 = vld [vmem:[%s2 + $0x30] sm:$0xff]
  %v198 = vld [vmem:[%s2 + $0x38] sm:$0xff]
  %v199 = vld [vmem:[%s2 + $0x40] sm:$0xff]
  %v200 = vld [vmem:[%s2 + $0x48] sm:$0xff]
  %v201 = vld [vmem:[%s2 + $0x50] sm:$0xff]
  %v202 = vld [vmem:[%s2 + $0x58] sm:$0xff]
  %v203 = vld [vmem:[%s2 + $0x60] sm:$0xff]
  %v204 = vld [vmem:[%s2 + $0x68] sm:$0xff]
  %v205 = vld [vmem:[%s2 + $0x70] sm:$0xff]
  %v206 = vld [vmem:[%s2 + $0x78] sm:$0xff]
  %208 = vset.pattern.permute.xlu0 0
  %209 = vperm.xlu0 %208, %v191
  %v210 = vpop.permute.xlu0 %209
  %213 = vset.pattern.permute.xlu0 0
  %214 = vperm.xlu0 %213, %v192
  %v215 = vpop.permute.xlu0 %214
  %218 = vset.pattern.permute.xlu0 0
  %219 = vperm.xlu0 %218, %v193
  %v220 = vpop.permute.xlu0 %219
  %223 = vset.pattern.permute.xlu0 0
  %224 = vperm.xlu0 %223, %v194
  %v225 = vpop.permute.xlu0 %224
  %228 = vset.pattern.permute.xlu0 0
  %229 = vperm.xlu0 %228, %v195
  %v230 = vpop.permute.xlu0 %229
  %233 = vset.pattern.permute.xlu0 0
  %234 = vperm.xlu0 %233, %v196
  %v235 = vpop.permute.xlu0 %234
  %238 = vset.pattern.permute.xlu0 0
  %239 = vperm.xlu0 %238, %v197
  %v240 = vpop.permute.xlu0 %239
  %243 = vset.pattern.permute.xlu0 0
  %244 = vperm.xlu0 %243, %v198
  %v245 = vpop.permute.xlu0 %244
  %248 = vset.pattern.permute.xlu0 0
  %249 = vperm.xlu0 %248, %v199
  %v250 = vpop.permute.xlu0 %249
  %253 = vset.pattern.permute.xlu0 0
  %254 = vperm.xlu0 %253, %v200
  %v255 = vpop.permute.xlu0 %254
  %258 = vset.pattern.permute.xlu0 0
  %259 = vperm.xlu0 %258, %v201
  %v260 = vpop.permute.xlu0 %259
  %263 = vset.pattern.permute.xlu0 0
  %264 = vperm.xlu0 %263, %v202
  %v265 = vpop.permute.xlu0 %264
  %268 = vset.pattern.permute.xlu0 0
  %269 = vperm.xlu0 %268, %v203
  %v270 = vpop.permute.xlu0 %269
  %273 = vset.pattern.permute.xlu0 0
  %274 = vperm.xlu0 %273, %v204
  %v275 = vpop.permute.xlu0 %274
  %278 = vset.pattern.permute.xlu0 0
  %279 = vperm.xlu0 %278, %v205
  %v280 = vpop.permute.xlu0 %279
  %283 = vset.pattern.permute.xlu0 0
  %284 = vperm.xlu0 %283, %v206
  %v285 = vpop.permute.xlu0 %284
  %v287 = vmul.f32 %v152, %v210
  %v288 = vmul.f32 %v154, %v215
  %v289 = vmul.f32 %v157, %v220
  %v290 = vmul.f32 %v159, %v225
  %v291 = vmul.f32 %v162, %v230
  %v292 = vmul.f32 %v164, %v235
  %v293 = vmul.f32 %v167, %v240
  %v294 = vmul.f32 %v169, %v245
  %v295 = vmul.f32 %v172, %v250
  %v296 = vmul.f32 %v174, %v255
  %v297 = vmul.f32 %v177, %v260
  %v298 = vmul.f32 %v179, %v265
  %v299 = vmul.f32 %v182, %v270
  %v300 = vmul.f32 %v184, %v275
  %v301 = vmul.f32 %v187, %v280
  %v302 = vmul.f32 %v189, %v285
  %v303 = vpack.c.bf16 %v287, %v287
  %v304 = vpack.c.bf16 %v288, %v288
  %v305 = vpack.c.bf16 %v289, %v289
  %v306 = vpack.c.bf16 %v290, %v290
  %v307 = vpack.c.bf16 %v291, %v291
  %v308 = vpack.c.bf16 %v292, %v292
  %v309 = vpack.c.bf16 %v293, %v293
  %v310 = vpack.c.bf16 %v294, %v294
  %v311 = vpack.c.bf16 %v295, %v295
  %v312 = vpack.c.bf16 %v296, %v296
  %v313 = vpack.c.bf16 %v297, %v297
  %v314 = vpack.c.bf16 %v298, %v298
  %v315 = vpack.c.bf16 %v299, %v299
  %v316 = vpack.c.bf16 %v300, %v300
  %v317 = vpack.c.bf16 %v301, %v301
  %v318 = vpack.c.bf16 %v302, %v302
  %319 = vst [vmem:[%s3] sm:$0xf] %v303
  %320 = vst [vmem:[%s3 + $0x4] sm:$0xf] %v304
  %321 = vst [vmem:[%s3 + $0x8] sm:$0xf] %v305
  %322 = vst [vmem:[%s3 + $0xc] sm:$0xf] %v306
  %323 = vst [vmem:[%s3 + $0x10] sm:$0xf] %v307
  %324 = vst [vmem:[%s3 + $0x14] sm:$0xf] %v308
  %325 = vst [vmem:[%s3 + $0x18] sm:$0xf] %v309
  %326 = vst [vmem:[%s3 + $0x1c] sm:$0xf] %v310
  %327 = vst [vmem:[%s3 + $0x20] sm:$0xf] %v311
  %328 = vst [vmem:[%s3 + $0x24] sm:$0xf] %v312
  %329 = vst [vmem:[%s3 + $0x28] sm:$0xf] %v313
  %330 = vst [vmem:[%s3 + $0x2c] sm:$0xf] %v314
  %331 = vst [vmem:[%s3 + $0x30] sm:$0xf] %v315
  %332 = vst [vmem:[%s3 + $0x34] sm:$0xf] %v316
  %333 = vst [vmem:[%s3 + $0x38] sm:$0xf] %v317
  %334 = vst [vmem:[%s3 + $0x3c] sm:$0xf] %v318
  // Predicated region
  $region14: #{gnn_basic_apply.5} parent=0 // pred_check
    _
  $region15: #{gnn_basic_apply.5} parent=0 // pred_check_branch
    %336 = sbr.rel (0) target = $region17
  $region16: #{gnn_basic_apply.5} parent=0 // pred_region
    _
  $region17: #{gnn_basic_apply.5} parent=0 // pred_fallthru
    _
  // Predicated region
  $region18: #{gnn_basic_apply.5} parent=0 // pred_check
    _
  $region19: #{gnn_basic_apply.5} parent=0 // pred_check_branch
    %338 = sbr.rel (0) target = $region21
  $region20: #{gnn_basic_apply.5} parent=0 // pred_region
    _
  $region21: #{gnn_basic_apply.5} parent=0 // pred_fallthru
    _

// kernel: gnn_basic_apply.9
$region0: #{gnn_basic_apply.9}
  #allocation0 [shape = 'u32[]', space=smem, size = 0x4, offset = 0x4, fixed_abs, tag = 'smem constant byte address 0x4 - core index']
  #allocation1 [shape = 'u32[72,128]{1,0:T(1,128)}', space=vmem, size = 0x9000, scoped, tag = 'internal scratch']
  %s0 = inlined_call_operand.vmem [shape: bf16[128,128], index: 0, kind: input, shape index: {}]
  %s1 = inlined_call_operand.vmem [shape: bf16[128,128], index: 1, kind: input, shape index: {}]
  %s2 = inlined_call_operand.vmem [shape: f32[1,128], index: 2, kind: input, shape index: {}]
  %s3 = inlined_call_operand.vmem [shape: f32[128,128], index: 3, kind: output, shape index: {}]
  %s4 = sld [smem:[#allocation0]]
  $region22: #{gnn_basic_apply.9} parent=0
    _
  %s6 = ssub.s32 1, %s4
  %s7 = scalar_select 0, %s6, %s4
  // Predicated region
  $region2: #{gnn_basic_apply.9} parent=0 // pred_check
    _
  $region3: #{gnn_basic_apply.9} parent=0 // pred_check_branch
    %9 = sbr.rel (0) target = $region5
  $region4: #{gnn_basic_apply.9} parent=0 // pred_region
    _
  $region5: #{gnn_basic_apply.9} parent=0 // pred_fallthru
    _
  // Predicated region
  $region6: #{gnn_basic_apply.9} parent=0 // pred_check
    _
  $region7: #{gnn_basic_apply.9} parent=0 // pred_check_branch
    %11 = sbr.rel (0) target = $region9
  $region8: #{gnn_basic_apply.9} parent=0 // pred_region
    _
  $region9: #{gnn_basic_apply.9} parent=0 // pred_fallthru
    _
  // Predicated region
  $region10: #{gnn_basic_apply.9} parent=0 // pred_check
    _
  $region11: #{gnn_basic_apply.9} parent=0 // pred_check_branch
    %13 = sbr.rel (0) target = $region13
  $region12: #{gnn_basic_apply.9} parent=0 // pred_region
    _
  $region13: #{gnn_basic_apply.9} parent=0 // pred_fallthru
    _
  %v14 = vld [vmem:[%s0] sm:$0xf]
  %v15 = vld [vmem:[%s0 + $0x4] sm:$0xf]
  %v16 = vld [vmem:[%s0 + $0x8] sm:$0xf]
  %v17 = vld [vmem:[%s0 + $0xc] sm:$0xf]
  %v18 = vld [vmem:[%s0 + $0x10] sm:$0xf]
  %v19 = vld [vmem:[%s0 + $0x14] sm:$0xf]
  %v20 = vld [vmem:[%s0 + $0x18] sm:$0xf]
  %v21 = vld [vmem:[%s0 + $0x1c] sm:$0xf]
  %v22 = vld [vmem:[%s0 + $0x20] sm:$0xf]
  %v23 = vld [vmem:[%s0 + $0x24] sm:$0xf]
  %v24 = vld [vmem:[%s0 + $0x28] sm:$0xf]
  %v25 = vld [vmem:[%s0 + $0x2c] sm:$0xf]
  %v26 = vld [vmem:[%s0 + $0x30] sm:$0xf]
  %v27 = vld [vmem:[%s0 + $0x34] sm:$0xf]
  %v28 = vld [vmem:[%s0 + $0x38] sm:$0xf]
  %v29 = vld [vmem:[%s0 + $0x3c] sm:$0xf]
  %v30 = vld [vmem:[%s1] sm:$0xf]
  %v31 = vld [vmem:[%s1 + $0x4] sm:$0xf]
  %v32 = vld [vmem:[%s1 + $0x8] sm:$0xf]
  %v33 = vld [vmem:[%s1 + $0xc] sm:$0xf]
  %v34 = vld [vmem:[%s1 + $0x10] sm:$0xf]
  %v35 = vld [vmem:[%s1 + $0x14] sm:$0xf]
  %v36 = vld [vmem:[%s1 + $0x18] sm:$0xf]
  %v37 = vld [vmem:[%s1 + $0x1c] sm:$0xf]
  %v38 = vld [vmem:[%s1 + $0x20] sm:$0xf]
  %v39 = vld [vmem:[%s1 + $0x24] sm:$0xf]
  %v40 = vld [vmem:[%s1 + $0x28] sm:$0xf]
  %v41 = vld [vmem:[%s1 + $0x2c] sm:$0xf]
  %v42 = vld [vmem:[%s1 + $0x30] sm:$0xf]
  %v43 = vld [vmem:[%s1 + $0x34] sm:$0xf]
  %v44 = vld [vmem:[%s1 + $0x38] sm:$0xf]
  %v45 = vld [vmem:[%s1 + $0x3c] sm:$0xf]
  %v46 = vld [vmem:[%s2] sm:$0x1]
  %v48 = vperm.slane %v46, 0
  %v66 = vunpack.c.l.b16 %v14
  %v67 = vunpack.c.l.b16 %v15
  %v68 = vunpack.c.l.b16 %v16
  %v69 = vunpack.c.l.b16 %v17
  %v70 = vunpack.c.l.b16 %v18
  %v71 = vunpack.c.l.b16 %v19
  %v72 = vunpack.c.l.b16 %v20
  %v73 = vunpack.c.l.b16 %v21
  %v74 = vunpack.c.l.b16 %v22
  %v75 = vunpack.c.l.b16 %v23
  %v76 = vunpack.c.l.b16 %v24
  %v77 = vunpack.c.l.b16 %v25
  %v78 = vunpack.c.l.b16 %v26
  %v79 = vunpack.c.l.b16 %v27
  %v80 = vunpack.c.l.b16 %v28
  %v81 = vunpack.c.l.b16 %v29
  %v82 = vpack.c.b16 %v67, %v66
  %v83 = vpack.c.b16 %v69, %v68
  %v84 = vpack.c.b16 %v71, %v70
  %v85 = vpack.c.b16 %v73, %v72
  %v86 = vpack.c.b16 %v75, %v74
  %v87 = vpack.c.b16 %v77, %v76
  %v88 = vpack.c.b16 %v79, %v78
  %v89 = vpack.c.b16 %v81, %v80
  %v114 = vunpack.c.l.b16 %v30
  %v115 = vunpack.c.l.b16 %v31
  %v116 = vunpack.c.l.b16 %v32
  %v117 = vunpack.c.l.b16 %v33
  %v118 = vunpack.c.l.b16 %v34
  %v119 = vunpack.c.l.b16 %v35
  %v120 = vunpack.c.l.b16 %v36
  %v121 = vunpack.c.l.b16 %v37
  %v122 = vunpack.c.l.b16 %v38
  %v123 = vunpack.c.l.b16 %v39
  %v124 = vunpack.c.l.b16 %v40
  %v125 = vunpack.c.l.b16 %v41
  %v126 = vunpack.c.l.b16 %v42
  %v127 = vunpack.c.l.b16 %v43
  %v128 = vunpack.c.l.b16 %v44
  %v129 = vunpack.c.l.b16 %v45
  %v130 = vpack.c.b16 %v115, %v114
  %v131 = vpack.c.b16 %v117, %v116
  %v132 = vpack.c.b16 %v119, %v118
  %v133 = vpack.c.b16 %v121, %v120
  %v134 = vpack.c.b16 %v123, %v122
  %v135 = vpack.c.b16 %v125, %v124
  %v136 = vpack.c.b16 %v127, %v126
  %v137 = vpack.c.b16 %v129, %v128
  %146 = vmatpush.bf16.msra.mxu0 %v137
  %147 = vmatpush.bf16.msra.mxu0 %v136
  %148 = vmatpush.bf16.msra.mxu0 %v135
  %149 = vmatpush.bf16.msra.mxu0 %v134
  %150 = vmatpush.bf16.msra.mxu0 %v133
  %151 = vmatpush.bf16.msra.mxu0 %v132
  %152 = vmatpush.bf16.msra.mxu0 %v131
  %153 = vmatpush.bf16.msra.mxu0 %v130
  %154 = vmatmul.bf16.gmra.mxu0 %v82
  %v155 = vpop.f32.mrf.mxu0
  %v156 = vadd.f32 %v48, %v155
  %v157 = vpop.f32.mrf.mxu0
  %v158 = vadd.f32 %v48, %v157
  %159 = vmatmul.bf16.gmra.mxu0 %v83
  %v160 = vpop.f32.mrf.mxu0
  %v161 = vadd.f32 %v48, %v160
  %v162 = vpop.f32.mrf.mxu0
  %v163 = vadd.f32 %v48, %v162
  %164 = vmatmul.bf16.gmra.mxu0 %v84
  %v165 = vpop.f32.mrf.mxu0
  %v166 = vadd.f32 %v48, %v165
  %v167 = vpop.f32.mrf.mxu0
  %v168 = vadd.f32 %v48, %v167
  %169 = vmatmul.bf16.gmra.mxu0 %v85
  %v170 = vpop.f32.mrf.mxu0
  %v171 = vadd.f32 %v48, %v170
  %v172 = vpop.f32.mrf.mxu0
  %v173 = vadd.f32 %v48, %v172
  %174 = vmatmul.bf16.gmra.mxu0 %v86
  %v175 = vpop.f32.mrf.mxu0
  %v176 = vadd.f32 %v48, %v175
  %v177 = vpop.f32.mrf.mxu0
  %v178 = vadd.f32 %v48, %v177
  %179 = vmatmul.bf16.gmra.mxu0 %v87
  %v180 = vpop.f32.mrf.mxu0
  %v181 = vadd.f32 %v48, %v180
  %v182 = vpop.f32.mrf.mxu0
  %v183 = vadd.f32 %v48, %v182
  %184 = vmatmul.bf16.gmra.mxu0 %v88
  %v185 = vpop.f32.mrf.mxu0
  %v186 = vadd.f32 %v48, %v185
  %v187 = vpop.f32.mrf.mxu0
  %v188 = vadd.f32 %v48, %v187
  %189 = vmatmul.bf16.gmra.mxu0 %v89
  %v190 = vpop.f32.mrf.mxu0
  %v191 = vadd.f32 %v48, %v190
  %v192 = vpop.f32.mrf.mxu0
  %v193 = vadd.f32 %v48, %v192
  %194 = vdwg.mxu0
  %195 = vst [vmem:[%s3] sm:$0xff] %v156
  %196 = vst [vmem:[%s3 + $0x8] sm:$0xff] %v158
  %197 = vst [vmem:[%s3 + $0x10] sm:$0xff] %v161
  %198 = vst [vmem:[%s3 + $0x18] sm:$0xff] %v163
  %199 = vst [vmem:[%s3 + $0x20] sm:$0xff] %v166
  %200 = vst [vmem:[%s3 + $0x28] sm:$0xff] %v168
  %201 = vst [vmem:[%s3 + $0x30] sm:$0xff] %v171
  %202 = vst [vmem:[%s3 + $0x38] sm:$0xff] %v173
  %203 = vst [vmem:[%s3 + $0x40] sm:$0xff] %v176
  %204 = vst [vmem:[%s3 + $0x48] sm:$0xff] %v178
  %205 = vst [vmem:[%s3 + $0x50] sm:$0xff] %v181
  %206 = vst [vmem:[%s3 + $0x58] sm:$0xff] %v183
  %207 = vst [vmem:[%s3 + $0x60] sm:$0xff] %v186
  %208 = vst [vmem:[%s3 + $0x68] sm:$0xff] %v188
  %209 = vst [vmem:[%s3 + $0x70] sm:$0xff] %v191
  %210 = vst [vmem:[%s3 + $0x78] sm:$0xff] %v193
  // Predicated region
  $region14: #{gnn_basic_apply.9} parent=0 // pred_check
    _
  $region15: #{gnn_basic_apply.9} parent=0 // pred_check_branch
    %212 = sbr.rel (0) target = $region17
  $region16: #{gnn_basic_apply.9} parent=0 // pred_region
    _
  $region17: #{gnn_basic_apply.9} parent=0 // pred_fallthru
    _
  // Predicated region
  $region18: #{gnn_basic_apply.9} parent=0 // pred_check
    _
  $region19: #{gnn_basic_apply.9} parent=0 // pred_check_branch
    %214 = sbr.rel (0) target = $region21
  $region20: #{gnn_basic_apply.9} parent=0 // pred_region
    _
  $region21: #{gnn_basic_apply.9} parent=0 // pred_fallthru
    _

</llo_original>
